<compile_context>
chip_gen: v6e
topology: v6e:2x2x1
jax: 0.10.0
libtpu: 0.0.40
codegen_flags: <defaults>
</compile_context>

<pallas_src>
import jax
import jax.numpy as jnp
from jax.experimental import pallas as pl
from jax.experimental.pallas import tpu as pltpu


def _round_up(n, m):
    return ((n + m - 1) // m) * m


def _mlp_kernel(xt_ref, w1_ref, b1_ref, w2_ref, b2_ref, w3_ref, b3_ref, o_ref):
    # fc1 + ReLU: [64, F] @ [F, TB] -> [64, TB]   (batch on lanes, contraction MXU-natural)
    h1 = jnp.dot(w1_ref[...], xt_ref[...], preferred_element_type=jnp.float32)
    h1 = jnp.maximum(h1 + b1_ref[...], 0.0)            # b1: [64, 1] broadcast over lanes
    # fc2 + ReLU: [32, 64] @ [64, TB] -> [32, TB]
    h2 = jnp.dot(w2_ref[...], h1.astype(w2_ref.dtype),
                 preferred_element_type=jnp.float32)
    h2 = jnp.maximum(h2 + b2_ref[...], 0.0)             # b2: [32, 1]
    # fc3: [1, 32] @ [32, TB] -> [1, TB]   (lane-dense output, no XLU transpose of h2)
    out = jnp.dot(w3_ref[...], h2.astype(w3_ref.dtype),
                  preferred_element_type=jnp.float32)
    o_ref[...] = out + b3_ref[0]                        # scalar bias from SMEM


def error_correction_forward(x, params, *, tb=8192, x_is_transposed=False,
                             compute_dtype=jnp.float32):
    """Forward pass of ErrorCorrectionModel.

    x:        [B, F] float (or [F, B] if x_is_transposed=True)
    params:   dict with PyTorch-layout weights:
                w1 [64, F], b1 [64, 1], w2 [32, 64], b2 [32, 1], w3 [1, 32], b3 [1]
    returns:  [B, 1] float32
    """
    w1, b1 = params["w1"], params["b1"]
    w2, b2 = params["w2"], params["b2"]
    w3, b3 = params["w3"], params["b3"]

    if x_is_transposed:
        xt = x.astype(jnp.float32)
        F, B = xt.shape
    else:
        x = x.astype(jnp.float32)
        B, F = x.shape
        # One-shot transpose; for repeated calls keep x as [F, B] upstream and pass
        # x_is_transposed=True to avoid this HBM round trip.
        xt = x.T

    # Batch tile: multiple of 128 (lane-dense blocks), capped near B for small inputs.
    tb = max(128, min(_round_up(tb, 128), _round_up(B, 128)))
    b_pad = _round_up(B, tb)
    num_blocks = b_pad // tb
    if b_pad != B:
        # Lane-dim zero pad (dense, cheap); padded columns compute garbage and are sliced off.
        xt = jnp.pad(xt, ((0, 0), (0, b_pad - B)))

    # Optional reduced-precision streaming (f32 accumulation in the kernel).
    xt = xt.astype(compute_dtype)
    w1c = w1.astype(compute_dtype)
    w2c = w2.astype(compute_dtype)
    w3c = w3.astype(compute_dtype)
    b1 = b1.astype(jnp.float32)
    b2 = b2.astype(jnp.float32)
    b3 = b3.astype(jnp.float32)

    const = lambda shape: pl.BlockSpec(shape, lambda i: (0, 0))  # VMEM-resident weights

    out_row = pl.pallas_call(
        _mlp_kernel,
        out_shape=jax.ShapeDtypeStruct((1, b_pad), jnp.float32),
        grid=(num_blocks,),
        in_specs=[
            pl.BlockSpec((F, tb), lambda i: (0, i)),   # x_t: lane-dense streamed batch tiles
            const(w1c.shape), const(b1.shape),
            const(w2c.shape), const(b2.shape),
            const(w3c.shape),
            pl.BlockSpec(memory_space=pltpu.MemorySpace.SMEM),  # b3 scalar in SMEM
        ],
        out_specs=pl.BlockSpec((1, tb), lambda i: (0, i)),       # lane-dense output slab
        compiler_params=pltpu.CompilerParams(
            dimension_semantics=("parallel",)),  # megacore-shardable; disjoint out tiles
    )(xt, w1c, b1, w2c, b2, w3c, b3)

    return out_row[0, :B].reshape(B, 1)


def init_params(key, input_size):
    """Deterministic synthetic init mirroring the nn.Linear shapes (PyTorch [out, in] layout)."""
    k1, k2, k3, k4, k5, k6 = jax.random.split(key, 6)
    s1 = 1.0 / jnp.sqrt(float(input_size))
    s2 = 1.0 / jnp.sqrt(64.0)
    s3 = 1.0 / jnp.sqrt(32.0)
    return {
        "w1": jax.random.uniform(k1, (64, input_size), jnp.float32, -s1, s1),
        "b1": jax.random.uniform(k2, (64, 1), jnp.float32, -s1, s1),
        "w2": jax.random.uniform(k3, (32, 64), jnp.float32, -s2, s2),
        "b2": jax.random.uniform(k4, (32, 1), jnp.float32, -s2, s2),
        "w3": jax.random.uniform(k5, (1, 32), jnp.float32, -s3, s3),
        "b3": jax.random.uniform(k6, (1,), jnp.float32, -s3, s3),
    }


if __name__ == "__main__":
    key = jax.random.PRNGKey(0)
    kx, kp = jax.random.split(key)

    batch = 8
    input_size = 16  # small synthetic feature count (X_train.shape[1])

    x = jax.random.normal(kx, (batch, input_size), jnp.float32)
    params = init_params(kp, input_size)

    out = error_correction_forward(x, params)
    out = jax.block_until_ready(out)

    # Reference check in plain JAX (PyTorch semantics: x @ W.T + b at each layer).
    h1 = jnp.maximum(x @ params["w1"].T + params["b1"].T, 0.0)
    h2 = jnp.maximum(h1 @ params["w2"].T + params["b2"].T, 0.0)
    ref = h2 @ params["w3"].T + params["b3"]
    assert out.shape == (batch, 1)
    assert jnp.allclose(out, ref, atol=1e-5, rtol=1e-5)

    print("KERNEL_OK")
</pallas_src>

<mosaic_0001>
module attributes {stable_mosaic.version = 11 : i64} {
  func.func @_mlp_kernel(%arg0: i32, %arg1: memref<16x128xf32, #tpu.memory_space<vmem>>, %arg2: memref<64x16xf32, #tpu.memory_space<vmem>>, %arg3: memref<64x1xf32, #tpu.memory_space<vmem>>, %arg4: memref<32x64xf32, #tpu.memory_space<vmem>>, %arg5: memref<32x1xf32, #tpu.memory_space<vmem>>, %arg6: memref<1x32xf32, #tpu.memory_space<vmem>>, %arg7: memref<1xf32, #tpu.memory_space<smem>>, %arg8: memref<1x128xf32, #tpu.memory_space<vmem>>) attributes {dimension_semantics = [#tpu.dimension_semantics<parallel>], iteration_bounds = array<i64: 1>, scalar_prefetch = 0 : i64, scratch_operands = 0 : i64, tpu.core_type = #tpu.core_type<tc>, window_params = [{transform_indices = @transform_0, window_bounds = array<i64: 16, 128>}, {pipeline_mode = #tpu.pipeline_mode<synchronous>, transform_indices = @transform_1, window_bounds = array<i64: 64, 16>}, {pipeline_mode = #tpu.pipeline_mode<synchronous>, transform_indices = @transform_2, window_bounds = array<i64: 64, 1>}, {pipeline_mode = #tpu.pipeline_mode<synchronous>, transform_indices = @transform_3, window_bounds = array<i64: 32, 64>}, {pipeline_mode = #tpu.pipeline_mode<synchronous>, transform_indices = @transform_4, window_bounds = array<i64: 32, 1>}, {pipeline_mode = #tpu.pipeline_mode<synchronous>, transform_indices = @transform_5, window_bounds = array<i64: 1, 32>}, {transform_indices = @transform_6, window_bounds = array<i64: 1>}, {transform_indices = @transform_7, window_bounds = array<i64: 1, 128>}]} {
    %c0 = arith.constant 0 : index
    %c0_0 = arith.constant 0 : index
    %0 = vector.load %arg2[%c0, %c0_0] : memref<64x16xf32, #tpu.memory_space<vmem>>, vector<64x16xf32>
    %c0_1 = arith.constant 0 : index
    %c0_2 = arith.constant 0 : index
    %1 = vector.load %arg1[%c0_1, %c0_2] : memref<16x128xf32, #tpu.memory_space<vmem>>, vector<16x128xf32>
    %cst = arith.constant dense<0.000000e+00> : vector<64x128xf32>
    %2 = tpu.matmul %0, %1, %cst {dimension_numbers = #tpu.dot_dimension_numbers<[1], [0], [0], [1], [0, 0, 1, 1], [], []>} : vector<64x16xf32>, vector<16x128xf32>, vector<64x128xf32> -> vector<64x128xf32>
    %c0_3 = arith.constant 0 : index
    %c0_4 = arith.constant 0 : index
    %3 = vector.load %arg3[%c0_3, %c0_4] : memref<64x1xf32, #tpu.memory_space<vmem>>, vector<64x1xf32>
    %4 = vector.broadcast %3 : vector<64x1xf32> to vector<64x128xf32>
    %5 = arith.addf %2, %4 : vector<64x128xf32>
    %cst_5 = arith.constant 0.000000e+00 : f32
    %6 = vector.broadcast %cst_5 : f32 to vector<64x128xf32>
    %7 = arith.maximumf %5, %6 : vector<64x128xf32>
    %c0_6 = arith.constant 0 : index
    %c0_7 = arith.constant 0 : index
    %8 = vector.load %arg4[%c0_6, %c0_7] : memref<32x64xf32, #tpu.memory_space<vmem>>, vector<32x64xf32>
    %cst_8 = arith.constant dense<0.000000e+00> : vector<32x128xf32>
    %9 = tpu.matmul %8, %7, %cst_8 {dimension_numbers = #tpu.dot_dimension_numbers<[1], [0], [0], [1], [0, 0, 1, 1], [], []>} : vector<32x64xf32>, vector<64x128xf32>, vector<32x128xf32> -> vector<32x128xf32>
    %c0_9 = arith.constant 0 : index
    %c0_10 = arith.constant 0 : index
    %10 = vector.load %arg5[%c0_9, %c0_10] : memref<32x1xf32, #tpu.memory_space<vmem>>, vector<32x1xf32>
    %11 = vector.broadcast %10 : vector<32x1xf32> to vector<32x128xf32>
    %12 = arith.addf %9, %11 : vector<32x128xf32>
    %cst_11 = arith.constant 0.000000e+00 : f32
    %13 = vector.broadcast %cst_11 : f32 to vector<32x128xf32>
    %14 = arith.maximumf %12, %13 : vector<32x128xf32>
    %c0_12 = arith.constant 0 : index
    %c0_13 = arith.constant 0 : index
    %15 = vector.load %arg6[%c0_12, %c0_13] : memref<1x32xf32, #tpu.memory_space<vmem>>, vector<1x32xf32>
    %cst_14 = arith.constant dense<0.000000e+00> : vector<1x128xf32>
    %16 = tpu.matmul %15, %14, %cst_14 {dimension_numbers = #tpu.dot_dimension_numbers<[1], [0], [0], [1], [0, 0, 1, 1], [], []>} : vector<1x32xf32>, vector<32x128xf32>, vector<1x128xf32> -> vector<1x128xf32>
    %c0_15 = arith.constant 0 : index
    %17 = memref.load %arg7[%c0_15] : memref<1xf32, #tpu.memory_space<smem>>
    %18 = vector.broadcast %17 : f32 to vector<1x128xf32>
    %19 = arith.addf %16, %18 : vector<1x128xf32>
    %c0_16 = arith.constant 0 : index
    %c0_17 = arith.constant 0 : index
    %20 = vector.load %arg8[%c0_16, %c0_17] : memref<1x128xf32, #tpu.memory_space<vmem>>, vector<1x128xf32>
    tpu.vector_store %arg8[%c0_16, %c0_17], %19 {strides = array<i32>} : memref<1x128xf32, #tpu.memory_space<vmem>>, vector<1x128xf32>,
    return
  }
  func.func @transform_0(%arg0: i32) -> (i32, i32) {
    %c0_i32 = arith.constant 0 : i32
    %c0_i32_0 = arith.constant 0 : i32
    return %c0_i32, %arg0 : i32, i32
  }
  func.func @transform_1(%arg0: i32) -> (i32, i32) {
    %c0_i32 = arith.constant 0 : i32
    %c0_i32_0 = arith.constant 0 : i32
    %c0_i32_1 = arith.constant 0 : i32
    return %c0_i32, %c0_i32_0 : i32, i32
  }
  func.func @transform_2(%arg0: i32) -> (i32, i32) {
    %c0_i32 = arith.constant 0 : i32
    %c0_i32_0 = arith.constant 0 : i32
    %c0_i32_1 = arith.constant 0 : i32
    return %c0_i32, %c0_i32_0 : i32, i32
  }
  func.func @transform_3(%arg0: i32) -> (i32, i32) {
    %c0_i32 = arith.constant 0 : i32
    %c0_i32_0 = arith.constant 0 : i32
    %c0_i32_1 = arith.constant 0 : i32
    return %c0_i32, %c0_i32_0 : i32, i32
  }
  func.func @transform_4(%arg0: i32) -> (i32, i32) {
    %c0_i32 = arith.constant 0 : i32
    %c0_i32_0 = arith.constant 0 : i32
    %c0_i32_1 = arith.constant 0 : i32
    return %c0_i32, %c0_i32_0 : i32, i32
  }
  func.func @transform_5(%arg0: i32) -> (i32, i32) {
    %c0_i32 = arith.constant 0 : i32
    %c0_i32_0 = arith.constant 0 : i32
    %c0_i32_1 = arith.constant 0 : i32
    return %c0_i32, %c0_i32_0 : i32, i32
  }
  func.func @transform_6(%arg0: i32) -> i32 {
    %c0_i32 = arith.constant 0 : i32
    %c0_i32_0 = arith.constant 0 : i32
    return %c0_i32 : i32
  }
  func.func @transform_7(%arg0: i32) -> (i32, i32) {
    %c0_i32 = arith.constant 0 : i32
    %c0_i32_0 = arith.constant 0 : i32
    return %c0_i32, %arg0 : i32, i32
  }
}

</mosaic_0001>

<llo_original>
// kernel: tpu_custom_call.1
$region0: #{tpu_custom_call.1}
  #allocation0 [shape = 'u32[]', space=smem, size = 0x4, offset = 0x4, fixed_abs, tag = 'smem constant byte address 0x4 - core index']
  #allocation1 [shape = 'u32[144,128]{1,0:T(1,128)}', space=vmem, size = 0x12000, scoped, tag = 'internal scratch']
  #allocation2 [shape = 'f32[1]{0:T(128)S(6)}', space=smem, size = 0x200, scoped, tag = 'scoped memory for tpu_custom_call.1']
  %s0 = inlined_call_operand.vmem [shape: f32[16,128], index: 0, kind: input, shape index: {}]
  %s1 = inlined_call_operand.vmem [shape: f32[64,16], index: 1, kind: input, shape index: {}]
  %s2 = inlined_call_operand.vmem [shape: f32[64,1], index: 2, kind: input, shape index: {}]
  %s3 = inlined_call_operand.vmem [shape: f32[32,64], index: 3, kind: input, shape index: {}]
  %s4 = inlined_call_operand.vmem [shape: f32[32,1], index: 4, kind: input, shape index: {}]
  %s5 = inlined_call_operand.vmem [shape: f32[1,32], index: 5, kind: input, shape index: {}]
  %s6 = inlined_call_operand.<no memory space> [shape: f32[1], index: 6, kind: input, shape index: {}]
  %s7 = inlined_call_operand.hbm [shape: f32[1,128], index: 7, kind: output, shape index: {}]
  %s8 = sld [smem:[#allocation0]]
  $region38: #{tpu_custom_call.1} parent=0
    _
  %s10 = ssub.s32 1, %s8
  %s11 = scalar_select 0, %s10, %s8
  %12 = sst [smem:[#allocation2]] %s6
  $region1: #{tpu_custom_call.1} parent=0
    #allocation3 [shape = 'u8[512]{0}', space=vmem, size = 0x400, scoped, tag = 'output window, operand 0, single buffered']
    #allocation4 [shape = 's32[1]{0}', space=sflag, size = 0x4, scoped, tag = 'scoped memory for tpu_custom_call.1']
    %13 = vsyncpa [#allocation4], 0
    // Predicated region
    $region2: #{tpu_custom_call.1} parent=1 // pred_check
      _
    $region3: #{tpu_custom_call.1} parent=1 // pred_check_branch
      %15 = sbr.rel (0) target = $region5
    $region4: #{tpu_custom_call.1} parent=1 // pred_region
      _
    $region5: #{tpu_custom_call.1} parent=1 // pred_fallthru
      _
    // Predicated region
    $region6: #{tpu_custom_call.1} parent=1 // pred_check
      _
    $region7: #{tpu_custom_call.1} parent=1 // pred_check_branch
      %17 = sbr.rel (0) target = $region9
    $region8: #{tpu_custom_call.1} parent=1 // pred_region
      _
    $region9: #{tpu_custom_call.1} parent=1 // pred_fallthru
      _
    // Predicated region
    $region10: #{tpu_custom_call.1} parent=1 // pred_check
      _
    $region11: #{tpu_custom_call.1} parent=1 // pred_check_branch
      %19 = sbr.rel (0) target = $region13
    $region12: #{tpu_custom_call.1} parent=1 // pred_region
      _
    $region13: #{tpu_custom_call.1} parent=1 // pred_fallthru
      _
    // Predicated region
    $region14: #{tpu_custom_call.1} parent=1 // pred_check
      _
    $region15: #{tpu_custom_call.1} parent=1 // pred_check_branch
      %21 = sbr.rel (0) target = $region17
    $region16: #{tpu_custom_call.1} parent=1 // pred_region
      _
    $region17: #{tpu_custom_call.1} parent=1 // pred_fallthru
      _
    // Predicated region
    $region18: #{tpu_custom_call.1} parent=1 // pred_check
      _
    $region19: #{tpu_custom_call.1} parent=1 // pred_check_branch
      %23 = sbr.rel (0) target = $region21
    $region20: #{tpu_custom_call.1} parent=1 // pred_region
      _
    $region21: #{tpu_custom_call.1} parent=1 // pred_fallthru
      _
    // Predicated region
    $region22: #{tpu_custom_call.1} parent=1 // pred_check
      _
    $region23: #{tpu_custom_call.1} parent=1 // pred_check_branch
      %25 = sbr.rel (0) target = $region25
    $region24: #{tpu_custom_call.1} parent=1 // pred_region
      _
    $region25: #{tpu_custom_call.1} parent=1 // pred_fallthru
      _
    // Predicated region
    $region26: #{tpu_custom_call.1} parent=1 // pred_check
      _
    $region27: #{tpu_custom_call.1} parent=1 // pred_check_branch
      %27 = sbr.rel (0) target = $region29
    $region28: #{tpu_custom_call.1} parent=1 // pred_region
      _
    $region29: #{tpu_custom_call.1} parent=1 // pred_fallthru
      _
    %v28 = vld [vmem:[%s1] sm:$0xff]
    %v29 = vld [vmem:[%s1 + $0x8] sm:$0xff]
    %v30 = vld [vmem:[%s1 + $0x10] sm:$0xff]
    %v31 = vld [vmem:[%s1 + $0x18] sm:$0xff]
    %v32 = vld [vmem:[%s1 + $0x20] sm:$0xff]
    %v33 = vld [vmem:[%s1 + $0x28] sm:$0xff]
    %v34 = vld [vmem:[%s1 + $0x30] sm:$0xff]
    %v35 = vld [vmem:[%s1 + $0x38] sm:$0xff]
    %v36 = vld [vmem:[%s0] sm:$0xff]
    %v37 = vld [vmem:[%s0 + $0x8] sm:$0xff]
    %v38 = vld [vmem:[%s2] sm:$0xff]
    %v39 = vld [vmem:[%s2 + $0x8] sm:$0xff]
    %v40 = vld [vmem:[%s2 + $0x10] sm:$0xff]
    %v41 = vld [vmem:[%s2 + $0x18] sm:$0xff]
    %v42 = vld [vmem:[%s2 + $0x20] sm:$0xff]
    %v43 = vld [vmem:[%s2 + $0x28] sm:$0xff]
    %v44 = vld [vmem:[%s2 + $0x30] sm:$0xff]
    %v45 = vld [vmem:[%s2 + $0x38] sm:$0xff]
    %47 = vset.pattern.permute.xlu0 0
    %48 = vperm.xlu0 %47, %v38
    %v49 = vpop.permute.xlu0 %48
    %52 = vset.pattern.permute.xlu0 0
    %53 = vperm.xlu0 %52, %v39
    %v54 = vpop.permute.xlu0 %53
    %57 = vset.pattern.permute.xlu0 0
    %58 = vperm.xlu0 %57, %v40
    %v59 = vpop.permute.xlu0 %58
    %62 = vset.pattern.permute.xlu0 0
    %63 = vperm.xlu0 %62, %v41
    %v64 = vpop.permute.xlu0 %63
    %67 = vset.pattern.permute.xlu0 0
    %68 = vperm.xlu0 %67, %v42
    %v69 = vpop.permute.xlu0 %68
    %72 = vset.pattern.permute.xlu0 0
    %73 = vperm.xlu0 %72, %v43
    %v74 = vpop.permute.xlu0 %73
    %77 = vset.pattern.permute.xlu0 0
    %78 = vperm.xlu0 %77, %v44
    %v79 = vpop.permute.xlu0 %78
    %82 = vset.pattern.permute.xlu0 0
    %83 = vperm.xlu0 %82, %v45
    %v84 = vpop.permute.xlu0 %83
    %vm86 = vcmask 130048
    %v88 = vsel %vm86, %v28, 0
    %v91 = vsel %vm86, %v29, 0
    %v94 = vsel %vm86, %v30, 0
    %v97 = vsel %vm86, %v31, 0
    %v100 = vsel %vm86, %v32, 0
    %v103 = vsel %vm86, %v33, 0
    %v106 = vsel %vm86, %v34, 0
    %v109 = vsel %vm86, %v35, 0
    %111 = vmatprep.subr.mxu0 0.0
    %112 = vmatpush1.msra.mxu0 0.0
    %113 = vmatprep.subr.mxu0 0.0
    %114 = vmatpush1.msra.mxu0 0.0
    %115 = vmatprep.subr.mxu0 0.0
    %116 = vmatpush1.msra.mxu0 0.0
    %117 = vmatprep.subr.mxu0 0.0
    %118 = vmatpush1.msra.mxu0 0.0
    %119 = vmatprep.subr.mxu0 0.0
    %120 = vmatpush1.msra.mxu0 0.0
    %121 = vmatprep.subr.mxu0 0.0
    %122 = vmatpush1.msra.mxu0 0.0
    %123 = vmatprep.subr.mxu0 0.0
    %124 = vmatpush1.msra.mxu0 0.0
    %125 = vmatprep.subr.mxu0 0.0
    %126 = vmatpush1.msra.mxu0 0.0
    %127 = vmatprep.subr.mxu0 0.0
    %128 = vmatpush1.msra.mxu0 0.0
    %129 = vmatprep.subr.mxu0 0.0
    %130 = vmatpush1.msra.mxu0 0.0
    %131 = vmatprep.subr.mxu0 0.0
    %132 = vmatpush1.msra.mxu0 0.0
    %133 = vmatprep.subr.mxu0 0.0
    %134 = vmatpush1.msra.mxu0 0.0
    %135 = vmatprep.subr.mxu0 0.0
    %136 = vmatpush1.msra.mxu0 0.0
    %137 = vmatprep.subr.mxu0 0.0
    %138 = vmatpush1.msra.mxu0 0.0
    %139 = vmatprep.subr.mxu0 0.0
    %140 = vmatpush1.msra.mxu0 %v37
    %141 = vmatprep.subr.mxu0 0.0
    %142 = vmatpush1.msra.mxu0 %v36
    %143 = vmatprep.subr.mxu0 0.0
    %144 = vmatpush2.msra.mxu0 0.0
    %145 = vmatprep.subr.mxu0 0.0
    %146 = vmatpush2.msra.mxu0 0.0
    %147 = vmatprep.subr.mxu0 0.0
    %148 = vmatpush2.msra.mxu0 0.0
    %149 = vmatprep.subr.mxu0 0.0
    %150 = vmatpush2.msra.mxu0 0.0
    %151 = vmatprep.subr.mxu0 0.0
    %152 = vmatpush2.msra.mxu0 0.0
    %153 = vmatprep.subr.mxu0 0.0
    %154 = vmatpush2.msra.mxu0 0.0
    %155 = vmatprep.subr.mxu0 0.0
    %156 = vmatpush2.msra.mxu0 0.0
    %157 = vmatprep.subr.mxu0 0.0
    %158 = vmatpush2.msra.mxu0 0.0
    %159 = vmatprep.subr.mxu0 0.0
    %160 = vmatpush2.msra.mxu0 0.0
    %161 = vmatprep.subr.mxu0 0.0
    %162 = vmatpush2.msra.mxu0 0.0
    %163 = vmatprep.subr.mxu0 0.0
    %164 = vmatpush2.msra.mxu0 0.0
    %165 = vmatprep.subr.mxu0 0.0
    %166 = vmatpush2.msra.mxu0 0.0
    %167 = vmatprep.subr.mxu0 0.0
    %168 = vmatpush2.msra.mxu0 0.0
    %169 = vmatprep.subr.mxu0 0.0
    %170 = vmatpush2.msra.mxu0 0.0
    %171 = vmatprep.subr.mxu0 0.0
    %172 = vmatpush2.msra.mxu0 0.0
    %173 = vmatprep.subr.mxu0 0.0
    %174 = vmatpush2.msra.mxu0 0.0
    %175 = vmatprep.mubr.f32.mxu0 0.0
    %176 = vmatmul.mubr.f32.gmra.mxu0 %v88
    %v177 = vpop.f32.mrf.mxu0
    %v178 = vadd.f32 %v49, %v177
    %v179 = vpop.f32.mrf.mxu0
    %180 = vmatprep.mubr.f32.mxu0 0.0
    %181 = vmatmul.mubr.f32.gmra.mxu0 %v91
    %v182 = vpop.f32.mrf.mxu0
    %v183 = vadd.f32 %v54, %v182
    %v184 = vpop.f32.mrf.mxu0
    %185 = vmatprep.mubr.f32.mxu0 0.0
    %186 = vmatmul.mubr.f32.gmra.mxu0 %v94
    %v187 = vpop.f32.mrf.mxu0
    %v188 = vadd.f32 %v59, %v187
    %v189 = vpop.f32.mrf.mxu0
    %190 = vmatprep.mubr.f32.mxu0 0.0
    %191 = vmatmul.mubr.f32.gmra.mxu0 %v97
    %v192 = vpop.f32.mrf.mxu0
    %v193 = vadd.f32 %v64, %v192
    %v194 = vpop.f32.mrf.mxu0
    %195 = vmatprep.mubr.f32.mxu0 0.0
    %196 = vmatmul.mubr.f32.gmra.mxu0 %v100
    %v197 = vpop.f32.mrf.mxu0
    %v198 = vadd.f32 %v69, %v197
    %v199 = vpop.f32.mrf.mxu0
    %200 = vmatprep.mubr.f32.mxu0 0.0
    %201 = vmatmul.mubr.f32.gmra.mxu0 %v103
    %v202 = vpop.f32.mrf.mxu0
    %v203 = vadd.f32 %v74, %v202
    %v204 = vpop.f32.mrf.mxu0
    %205 = vmatprep.mubr.f32.mxu0 0.0
    %206 = vmatmul.mubr.f32.gmra.mxu0 %v106
    %v207 = vpop.f32.mrf.mxu0
    %v208 = vadd.f32 %v79, %v207
    %v209 = vpop.f32.mrf.mxu0
    %210 = vmatprep.mubr.f32.mxu0 0.0
    %211 = vmatmul.mubr.f32.gmra.mxu0 %v109
    %v212 = vpop.f32.mrf.mxu0
    %v213 = vadd.f32 %v84, %v212
    %v214 = vpop.f32.mrf.mxu0
    %215 = vdwg.mxu0
    %v216 = vmax.f32 %v178, 0.0
    %v217 = vmax.f32 %v183, 0.0
    %v218 = vmax.f32 %v188, 0.0
    %v219 = vmax.f32 %v193, 0.0
    %v220 = vmax.f32 %v198, 0.0
    %v221 = vmax.f32 %v203, 0.0
    %v222 = vmax.f32 %v208, 0.0
    %v223 = vmax.f32 %v213, 0.0
    %v224 = vld [vmem:[%s3] sm:$0xff]
    %v225 = vld [vmem:[%s3 + $0x8] sm:$0xff]
    %v226 = vld [vmem:[%s3 + $0x10] sm:$0xff]
    %v227 = vld [vmem:[%s3 + $0x18] sm:$0xff]
    %v228 = vld [vmem:[%s4] sm:$0xff]
    %v229 = vld [vmem:[%s4 + $0x8] sm:$0xff]
    %v230 = vld [vmem:[%s4 + $0x10] sm:$0xff]
    %v231 = vld [vmem:[%s4 + $0x18] sm:$0xff]
    %233 = vset.pattern.permute.xlu0 0
    %234 = vperm.xlu0 %233, %v228
    %v235 = vpop.permute.xlu0 %234
    %238 = vset.pattern.permute.xlu0 0
    %239 = vperm.xlu0 %238, %v229
    %v240 = vpop.permute.xlu0 %239
    %243 = vset.pattern.permute.xlu0 0
    %244 = vperm.xlu0 %243, %v230
    %v245 = vpop.permute.xlu0 %244
    %248 = vset.pattern.permute.xlu0 0
    %249 = vperm.xlu0 %248, %v231
    %v250 = vpop.permute.xlu0 %249
    %vm252 = vcmask 523264
    %v254 = vsel %vm252, %v224, 0
    %v257 = vsel %vm252, %v225, 0
    %v260 = vsel %vm252, %v226, 0
    %v263 = vsel %vm252, %v227, 0
    %265 = vmatprep.subr.mxu0 0.0
    %266 = vmatpush1.msra.mxu0 0.0
    %267 = vmatprep.subr.mxu0 0.0
    %268 = vmatpush1.msra.mxu0 0.0
    %269 = vmatprep.subr.mxu0 0.0
    %270 = vmatpush1.msra.mxu0 0.0
    %271 = vmatprep.subr.mxu0 0.0
    %272 = vmatpush1.msra.mxu0 0.0
    %273 = vmatprep.subr.mxu0 0.0
    %274 = vmatpush1.msra.mxu0 0.0
    %275 = vmatprep.subr.mxu0 0.0
    %276 = vmatpush1.msra.mxu0 0.0
    %277 = vmatprep.subr.mxu0 0.0
    %278 = vmatpush1.msra.mxu0 0.0
    %279 = vmatprep.subr.mxu0 0.0
    %280 = vmatpush1.msra.mxu0 0.0
    %281 = vmatprep.subr.mxu0 0.0
    %282 = vmatpush1.msra.mxu0 %v223
    %283 = vmatprep.subr.mxu0 0.0
    %284 = vmatpush1.msra.mxu0 %v222
    %285 = vmatprep.subr.mxu0 0.0
    %286 = vmatpush1.msra.mxu0 %v221
    %287 = vmatprep.subr.mxu0 0.0
    %288 = vmatpush1.msra.mxu0 %v220
    %289 = vmatprep.subr.mxu0 0.0
    %290 = vmatpush1.msra.mxu0 %v219
    %291 = vmatprep.subr.mxu0 0.0
    %292 = vmatpush1.msra.mxu0 %v218
    %293 = vmatprep.subr.mxu0 0.0
    %294 = vmatpush1.msra.mxu0 %v217
    %295 = vmatprep.subr.mxu0 0.0
    %296 = vmatpush1.msra.mxu0 %v216
    %297 = vmatprep.subr.mxu0 0.0
    %298 = vmatpush2.msra.mxu0 0.0
    %299 = vmatprep.subr.mxu0 0.0
    %300 = vmatpush2.msra.mxu0 0.0
    %301 = vmatprep.subr.mxu0 0.0
    %302 = vmatpush2.msra.mxu0 0.0
    %303 = vmatprep.subr.mxu0 0.0
    %304 = vmatpush2.msra.mxu0 0.0
    %305 = vmatprep.subr.mxu0 0.0
    %306 = vmatpush2.msra.mxu0 0.0
    %307 = vmatprep.subr.mxu0 0.0
    %308 = vmatpush2.msra.mxu0 0.0
    %309 = vmatprep.subr.mxu0 0.0
    %310 = vmatpush2.msra.mxu0 0.0
    %311 = vmatprep.subr.mxu0 0.0
    %312 = vmatpush2.msra.mxu0 0.0
    %313 = vmatprep.subr.mxu0 0.0
    %314 = vmatpush2.msra.mxu0 0.0
    %315 = vmatprep.subr.mxu0 0.0
    %316 = vmatpush2.msra.mxu0 0.0
    %317 = vmatprep.subr.mxu0 0.0
    %318 = vmatpush2.msra.mxu0 0.0
    %319 = vmatprep.subr.mxu0 0.0
    %320 = vmatpush2.msra.mxu0 0.0
    %321 = vmatprep.subr.mxu0 0.0
    %322 = vmatpush2.msra.mxu0 0.0
    %323 = vmatprep.subr.mxu0 0.0
    %324 = vmatpush2.msra.mxu0 0.0
    %325 = vmatprep.subr.mxu0 0.0
    %326 = vmatpush2.msra.mxu0 0.0
    %327 = vmatprep.subr.mxu0 0.0
    %328 = vmatpush2.msra.mxu0 0.0
    %329 = vmatprep.mubr.f32.mxu0 0.0
    %330 = vmatmul.mubr.f32.gmra.mxu0 %v254
    %v331 = vpop.f32.mrf.mxu0
    %v332 = vadd.f32 %v235, %v331
    %v333 = vpop.f32.mrf.mxu0
    %334 = vmatprep.mubr.f32.mxu0 0.0
    %335 = vmatmul.mubr.f32.gmra.mxu0 %v257
    %v336 = vpop.f32.mrf.mxu0
    %v337 = vadd.f32 %v240, %v336
    %v338 = vpop.f32.mrf.mxu0
    %339 = vmatprep.mubr.f32.mxu0 0.0
    %340 = vmatmul.mubr.f32.gmra.mxu0 %v260
    %v341 = vpop.f32.mrf.mxu0
    %v342 = vadd.f32 %v245, %v341
    %v343 = vpop.f32.mrf.mxu0
    %344 = vmatprep.mubr.f32.mxu0 0.0
    %345 = vmatmul.mubr.f32.gmra.mxu0 %v263
    %v346 = vpop.f32.mrf.mxu0
    %v347 = vadd.f32 %v250, %v346
    %v348 = vpop.f32.mrf.mxu0
    %349 = vdwg.mxu0
    %v350 = vmax.f32 %v332, 0.0
    %v351 = vmax.f32 %v337, 0.0
    %v352 = vmax.f32 %v342, 0.0
    %v353 = vmax.f32 %v347, 0.0
    %v354 = vld [vmem:[%s5] sm:$0x1]
    %s355 = sld [smem:[#allocation2]]
    %v356 = vstv %s355
    %vm357 = vcmask 261120
    %v359 = vsel %vm357, %v354, 0
    %361 = vmatprep.subr.mxu0 0.0
    %362 = vmatpush1.msra.mxu0 0.0
    %363 = vmatprep.subr.mxu0 0.0
    %364 = vmatpush1.msra.mxu0 0.0
    %365 = vmatprep.subr.mxu0 0.0
    %366 = vmatpush1.msra.mxu0 0.0
    %367 = vmatprep.subr.mxu0 0.0
    %368 = vmatpush1.msra.mxu0 0.0
    %369 = vmatprep.subr.mxu0 0.0
    %370 = vmatpush1.msra.mxu0 0.0
    %371 = vmatprep.subr.mxu0 0.0
    %372 = vmatpush1.msra.mxu0 0.0
    %373 = vmatprep.subr.mxu0 0.0
    %374 = vmatpush1.msra.mxu0 0.0
    %375 = vmatprep.subr.mxu0 0.0
    %376 = vmatpush1.msra.mxu0 0.0
    %377 = vmatprep.subr.mxu0 0.0
    %378 = vmatpush1.msra.mxu0 0.0
    %379 = vmatprep.subr.mxu0 0.0
    %380 = vmatpush1.msra.mxu0 0.0
    %381 = vmatprep.subr.mxu0 0.0
    %382 = vmatpush1.msra.mxu0 0.0
    %383 = vmatprep.subr.mxu0 0.0
    %384 = vmatpush1.msra.mxu0 0.0
    %385 = vmatprep.subr.mxu0 0.0
    %386 = vmatpush1.msra.mxu0 %v353
    %387 = vmatprep.subr.mxu0 0.0
    %388 = vmatpush1.msra.mxu0 %v352
    %389 = vmatprep.subr.mxu0 0.0
    %390 = vmatpush1.msra.mxu0 %v351
    %391 = vmatprep.subr.mxu0 0.0
    %392 = vmatpush1.msra.mxu0 %v350
    %393 = vmatprep.subr.mxu0 0.0
    %394 = vmatpush2.msra.mxu0 0.0
    %395 = vmatprep.subr.mxu0 0.0
    %396 = vmatpush2.msra.mxu0 0.0
    %397 = vmatprep.subr.mxu0 0.0
    %398 = vmatpush2.msra.mxu0 0.0
    %399 = vmatprep.subr.mxu0 0.0
    %400 = vmatpush2.msra.mxu0 0.0
    %401 = vmatprep.subr.mxu0 0.0
    %402 = vmatpush2.msra.mxu0 0.0
    %403 = vmatprep.subr.mxu0 0.0
    %404 = vmatpush2.msra.mxu0 0.0
    %405 = vmatprep.subr.mxu0 0.0
    %406 = vmatpush2.msra.mxu0 0.0
    %407 = vmatprep.subr.mxu0 0.0
    %408 = vmatpush2.msra.mxu0 0.0
    %409 = vmatprep.subr.mxu0 0.0
    %410 = vmatpush2.msra.mxu0 0.0
    %411 = vmatprep.subr.mxu0 0.0
    %412 = vmatpush2.msra.mxu0 0.0
    %413 = vmatprep.subr.mxu0 0.0
    %414 = vmatpush2.msra.mxu0 0.0
    %415 = vmatprep.subr.mxu0 0.0
    %416 = vmatpush2.msra.mxu0 0.0
    %417 = vmatprep.subr.mxu0 0.0
    %418 = vmatpush2.msra.mxu0 0.0
    %419 = vmatprep.subr.mxu0 0.0
    %420 = vmatpush2.msra.mxu0 0.0
    %421 = vmatprep.subr.mxu0 0.0
    %422 = vmatpush2.msra.mxu0 0.0
    %423 = vmatprep.subr.mxu0 0.0
    %424 = vmatpush2.msra.mxu0 0.0
    %425 = vmatprep.mubr.f32.mxu0 0.0
    %426 = vmatmul.mubr.f32.gmra.mxu0 %v359
    %v427 = vpop.f32.mrf.mxu0
    %v428 = vadd.f32 %v356, %v427
    %v429 = vpop.f32.mrf.mxu0
    %430 = vdwg.mxu0
    %431 = vst [vmem:[#allocation3] sm:$0x1] %v428
    // Predicated region
    $region30: #{tpu_custom_call.1} parent=1 // pred_check
      _
    $region31: #{tpu_custom_call.1} parent=1 // pred_check_branch
      %433 = sbr.rel (0) target = $region33
    $region32: #{tpu_custom_call.1} parent=1 // pred_region
      %s435 = ssub.s32 16, 16
      %436 = vsyncadd [#allocation4], %s435
      %s438 = sshll.u32 [#allocation3], 4
      %s439 = int_to_ptr.vmem [resolvable:$true] %s438
      %441 = dma.vmem_to_hbm [thread:$0]  %s439, 16, %s7, [#allocation4]
    $region33: #{tpu_custom_call.1} parent=1 // pred_fallthru
      _
    // Predicated region
    $region34: #{tpu_custom_call.1} parent=1 // pred_check
      _
    $region35: #{tpu_custom_call.1} parent=1 // pred_check_branch
      %443 = sbr.rel (0) target = $region37
    $region36: #{tpu_custom_call.1} parent=1 // pred_region
      %444 = dma.done [#allocation4], 16
    $region37: #{tpu_custom_call.1} parent=1 // pred_fallthru
      _
    %445 = vsyncpa [#allocation4], 1

</llo_original>
